<compile_context>
chip_gen: v7x
topology: tpu7x:2x2x1
jax: 0.10.0
libtpu: 0.0.40
codegen_flags: <defaults>
</compile_context>

<pallas_src>
import numpy as np
import jax
import jax.numpy as jnp
from jax.experimental import pallas as pl
from jax.experimental.pallas import tpu as pltpu


def transition_kernel(x_ref, scale_ref, bias_ref, w_ref, o_ref):
    # x_ref:     (TR, 2, W2, 2*Cin) activation dtype (bf16/f32)
    #            axis 1 = even/odd image row, lane halves = even/odd column.
    # scale_ref: (1, 2*Cin) f32  -- folded BN scale, duplicated for both columns
    # bias_ref:  (1, 2*Cin) f32  -- folded BN bias, duplicated
    # w_ref:     (Cin, Cout_pad) bf16 -- 1x1 conv weight^T, 0.25 pool scale folded in
    # o_ref:     (TR*W2, Cout_pad) output dtype
    tr, _, w2, two_cin = x_ref.shape
    cin = two_cin // 2

    scale = scale_ref[...]                       # (1, 2*Cin) f32
    bias = bias_ref[...]

    x = x_ref[...]                               # (tr, 2, w2, 2*cin)
    # BN + ReLU in f32 on the VPU at full lane width (both pool columns).
    r0 = jnp.maximum(x[:, 0].astype(jnp.float32) * scale + bias, 0.0)
    r1 = jnp.maximum(x[:, 1].astype(jnp.float32) * scale + bias, 0.0)
    # 2x2 sum-pool on the VPU; the 1/4 is folded into the conv weight.
    t = r0 + r1                                  # (tr, w2, 2*cin)
    pooled = t[..., :cin] + t[..., cin:]         # (tr, w2, cin)

    # 1x1 conv as a single matmul on the pooled activations (4x fewer rows
    # than conv-then-pool).  bf16 operands, f32 accumulation.
    lhs = pooled.reshape(tr * w2, cin).astype(jnp.bfloat16)
    o_ref[...] = jnp.dot(lhs, w_ref[...],
                         preferred_element_type=jnp.float32).astype(o_ref.dtype)


def _tile_vmem_bytes(tr, w2, cin, cout_pad, x_bytes, out_bytes):
    """Rough per-grid-step VMEM footprint (double-buffered blocks + temps)."""
    in_blk = tr * 2 * w2 * 2 * cin * x_bytes
    out_blk = tr * w2 * cout_pad * out_bytes
    wgt = cin * cout_pad * 2
    par = 2 * 2 * cin * 4
    tmp = 2 * tr * w2 * 2 * cin * 4              # r0, r1 (f32)
    tmp += tr * w2 * cin * (4 + 2)               # pooled f32 + bf16 lhs
    tmp += tr * w2 * cout_pad * 4                # f32 matmul result
    return 2 * (in_blk + out_blk + wgt + par) + tmp


def _pick_tile_rows(total_rows, w2, cin, cout_pad, x_bytes, out_bytes,
                    budget_bytes=24 * 1024 * 1024):
    """Pooled rows per tile.

    Must divide total_rows; the flattened output block (TR*W2) must be a
    multiple of 8 or the full extent ((8,128) rule); prefer tiles that fit the
    VMEM budget and give >=2 grid steps (pipelining / megacore sharding)."""
    divs = [d for d in range(1, total_rows + 1) if total_rows % d == 0]
    legal = [d for d in divs if d == total_rows or (d * w2) % 8 == 0]

    def cost(d):
        return _tile_vmem_bytes(d, w2, cin, cout_pad, x_bytes, out_bytes)

    fits = [d for d in legal if cost(d) <= budget_bytes]
    cands = fits if fits else [min(legal, key=cost)]
    multi = [d for d in cands if total_rows // d >= 2]
    return max(multi) if multi else max(cands)


def transition_forward_nhwc(x_nhwc, gamma, beta, running_mean, running_var,
                            conv_w, eps=1e-5, out_dtype=None):
    """Core NHWC path. x_nhwc: (N, H, W, Cin) -> (N, H//2, W//2, Cout)."""
    N, H, W, Cin = x_nhwc.shape
    Cout = conv_w.shape[0]
    assert H % 2 == 0 and W % 2 == 0, "2x2/2 avg-pool assumes even H and W"
    H2, W2 = H // 2, W // 2
    out_dtype = x_nhwc.dtype if out_dtype is None else out_dtype

    Cout_pad = max(128, ((Cout + 127) // 128) * 128)     # lane-dense output

    # Fold BN (eval mode) into per-channel scale/bias; duplicate to 2*Cin so
    # BN+ReLU runs at full lane width over both pool columns.
    inv_std = 1.0 / jnp.sqrt(running_var.astype(jnp.float32) + eps)
    scale = gamma.astype(jnp.float32) * inv_std
    bias = beta.astype(jnp.float32) - running_mean.astype(jnp.float32) * scale
    scale2 = jnp.tile(scale, 2).reshape(1, 2 * Cin)
    bias2 = jnp.tile(bias, 2).reshape(1, 2 * Cin)

    # 1x1 conv weight -> (Cin, Cout_pad) bf16, 1/4 pool scale folded in,
    # zero-padded on the output-channel axis for lane-dense stores.
    wmat = (conv_w.reshape(Cout, Cin).astype(jnp.float32).T * 0.25)
    wmat = jnp.pad(wmat.astype(jnp.bfloat16), ((0, 0), (0, Cout_pad - Cout)))

    # Pure-metadata reshape: expose the 2x2 pool partners and fold the batch
    # into the pooled-row axis:  (N, H, W, Cin) -> (N*H2, 2, W2, 2*Cin).
    total_rows = N * H2
    xr = x_nhwc.reshape(total_rows, 2, W2, 2 * Cin)

    x_bytes = jnp.dtype(x_nhwc.dtype).itemsize
    out_bytes = jnp.dtype(out_dtype).itemsize
    TR = _pick_tile_rows(total_rows, W2, Cin, Cout_pad, x_bytes, out_bytes)
    grid = (total_rows // TR,)

    vmem_est = _tile_vmem_bytes(TR, W2, Cin, Cout_pad, x_bytes, out_bytes)
    vmem_limit = int(min(100 * 1024 * 1024, max(32 * 1024 * 1024, 2 * vmem_est)))

    out = pl.pallas_call(
        transition_kernel,
        out_shape=jax.ShapeDtypeStruct((total_rows * W2, Cout_pad), out_dtype),
        grid_spec=pltpu.PrefetchScalarGridSpec(
            num_scalar_prefetch=0,
            grid=grid,
            in_specs=[
                pl.BlockSpec((TR, 2, W2, 2 * Cin), lambda t: (t, 0, 0, 0)),
                pl.BlockSpec((1, 2 * Cin), lambda t: (0, 0)),
                pl.BlockSpec((1, 2 * Cin), lambda t: (0, 0)),
                pl.BlockSpec((Cin, Cout_pad), lambda t: (0, 0)),
            ],
            out_specs=pl.BlockSpec((TR * W2, Cout_pad), lambda t: (t, 0)),
        ),
        compiler_params=pltpu.CompilerParams(
            dimension_semantics=("parallel",),
            vmem_limit_bytes=vmem_limit,
        ),
    )(xr, scale2, bias2, wmat)

    return out[:, :Cout].reshape(N, H2, W2, Cout)


def transition_forward(x_nchw, gamma, beta, running_mean, running_var, conv_w,
                       eps=1e-5, out_dtype=None):
    """PyTorch-compatible NCHW wrapper.

    x_nchw: (N, Cin, H, W); conv_w: (Cout, Cin, 1, 1) -> (N, Cout, H//2, W//2).
    NHWC models should call transition_forward_nhwc directly and skip these
    two HBM-bound relayout passes.
    """
    x_nhwc = jnp.transpose(x_nchw, (0, 2, 3, 1))
    out = transition_forward_nhwc(x_nhwc, gamma, beta, running_mean,
                                  running_var, conv_w, eps=eps,
                                  out_dtype=out_dtype)
    return jnp.transpose(out, (0, 3, 1, 2))


def transition_reference(x_nchw, gamma, beta, running_mean, running_var, conv_w,
                         eps=1e-5):
    N, Cin, H, W = x_nchw.shape
    Cout = conv_w.shape[0]
    xn = (x_nchw - running_mean[None, :, None, None]) / jnp.sqrt(
        running_var[None, :, None, None] + eps)
    xn = xn * gamma[None, :, None, None] + beta[None, :, None, None]
    y = jnp.maximum(xn, 0.0)
    z = jnp.einsum("nchw,oc->nohw", y, conv_w.reshape(Cout, Cin))
    z = z.reshape(N, Cout, H // 2, 2, W // 2, 2).mean(axis=(3, 5))
    return z


if __name__ == "__main__":
    N, Cin, Cout, H, W = 2, 4, 2, 16, 16
    key = jax.random.PRNGKey(0)
    k_x, k_g, k_b, k_rm, k_rv, k_w = jax.random.split(key, 6)

    # Activations streamed as bf16 (the recommended HBM dtype for this kernel).
    x = jax.random.normal(k_x, (N, Cin, H, W), jnp.float32).astype(jnp.bfloat16)
    gamma = jax.random.normal(k_g, (Cin,), jnp.float32) * 0.1 + 1.0
    beta = jax.random.normal(k_b, (Cin,), jnp.float32) * 0.1
    running_mean = jax.random.normal(k_rm, (Cin,), jnp.float32) * 0.1
    running_var = jnp.abs(jax.random.normal(k_rv, (Cin,), jnp.float32)) * 0.1 + 0.5
    conv_w = jax.random.normal(k_w, (Cout, Cin, 1, 1), jnp.float32) * 0.1

    out = transition_forward(x, gamma, beta, running_mean, running_var, conv_w)
    out = jax.block_until_ready(out)

    # Reference in f32 from the same (bf16-rounded) input.
    ref = transition_reference(x.astype(jnp.float32), gamma, beta,
                               running_mean, running_var, conv_w)
    assert out.shape == (N, Cout, H // 2, W // 2), out.shape
    # bf16 matmul operands / bf16 output -> looser tolerance than pure f32.
    np.testing.assert_allclose(np.asarray(out.astype(jnp.float32)),
                               np.asarray(ref), rtol=2e-2, atol=1e-2)
    print("KERNEL_OK")
</pallas_src>

<mosaic_0001>
module attributes {stable_mosaic.version = 11 : i64} {
  func.func @transition_kernel(%arg0: i32, %arg1: memref<8x2x8x8xbf16, #tpu.memory_space<vmem>>, %arg2: memref<1x8xf32, #tpu.memory_space<vmem>>, %arg3: memref<1x8xf32, #tpu.memory_space<vmem>>, %arg4: memref<4x128xbf16, #tpu.memory_space<vmem>>, %arg5: memref<64x128xbf16, #tpu.memory_space<vmem>>) attributes {dimension_semantics = [#tpu.dimension_semantics<parallel>], iteration_bounds = array<i64: 2>, scalar_prefetch = 0 : i64, scratch_operands = 0 : i64, tpu.core_type = #tpu.core_type<tc>, window_params = [{transform_indices = @transform_0, window_bounds = array<i64: 8, 2, 8, 8>}, {pipeline_mode = #tpu.pipeline_mode<synchronous>, transform_indices = @transform_1, window_bounds = array<i64: 1, 8>}, {pipeline_mode = #tpu.pipeline_mode<synchronous>, transform_indices = @transform_2, window_bounds = array<i64: 1, 8>}, {pipeline_mode = #tpu.pipeline_mode<synchronous>, transform_indices = @transform_3, window_bounds = array<i64: 4, 128>}, {transform_indices = @transform_4, window_bounds = array<i64: 64, 128>}]} {
    %c0 = arith.constant 0 : index
    %c0_0 = arith.constant 0 : index
    %0 = vector.load %arg2[%c0, %c0_0] : memref<1x8xf32, #tpu.memory_space<vmem>>, vector<1x8xf32>
    %c0_1 = arith.constant 0 : index
    %c0_2 = arith.constant 0 : index
    %1 = vector.load %arg3[%c0_1, %c0_2] : memref<1x8xf32, #tpu.memory_space<vmem>>, vector<1x8xf32>
    %c0_3 = arith.constant 0 : index
    %c0_4 = arith.constant 0 : index
    %c0_5 = arith.constant 0 : index
    %c0_6 = arith.constant 0 : index
    %2 = vector.load %arg1[%c0_3, %c0_4, %c0_5, %c0_6] : memref<8x2x8x8xbf16, #tpu.memory_space<vmem>>, vector<8x2x8x8xbf16>
    %3 = vector.extract_strided_slice %2 {offsets = [0, 0, 0, 0], sizes = [8, 1, 8, 8], strides = [1, 1, 1, 1]} : vector<8x2x8x8xbf16> to vector<8x1x8x8xbf16>
    %4 = vector.shape_cast %3 : vector<8x1x8x8xbf16> to vector<8x8x8xbf16>
    %5 = arith.extf %4 : vector<8x8x8xbf16> to vector<8x8x8xf32>
    %6 = vector.shape_cast %0 : vector<1x8xf32> to vector<1x1x8xf32>
    %7 = vector.broadcast %6 : vector<1x1x8xf32> to vector<8x8x8xf32>
    %8 = arith.mulf %5, %7 : vector<8x8x8xf32>
    %9 = vector.shape_cast %1 : vector<1x8xf32> to vector<1x1x8xf32>
    %10 = vector.broadcast %9 : vector<1x1x8xf32> to vector<8x8x8xf32>
    %11 = arith.addf %8, %10 : vector<8x8x8xf32>
    %cst = arith.constant 0.000000e+00 : f32
    %12 = vector.broadcast %cst : f32 to vector<8x8x8xf32>
    %13 = arith.maximumf %11, %12 : vector<8x8x8xf32>
    %14 = vector.extract_strided_slice %2 {offsets = [0, 1, 0, 0], sizes = [8, 1, 8, 8], strides = [1, 1, 1, 1]} : vector<8x2x8x8xbf16> to vector<8x1x8x8xbf16>
    %15 = vector.shape_cast %14 : vector<8x1x8x8xbf16> to vector<8x8x8xbf16>
    %16 = arith.extf %15 : vector<8x8x8xbf16> to vector<8x8x8xf32>
    %17 = vector.shape_cast %0 : vector<1x8xf32> to vector<1x1x8xf32>
    %18 = vector.broadcast %17 : vector<1x1x8xf32> to vector<8x8x8xf32>
    %19 = arith.mulf %16, %18 : vector<8x8x8xf32>
    %20 = vector.shape_cast %1 : vector<1x8xf32> to vector<1x1x8xf32>
    %21 = vector.broadcast %20 : vector<1x1x8xf32> to vector<8x8x8xf32>
    %22 = arith.addf %19, %21 : vector<8x8x8xf32>
    %cst_7 = arith.constant 0.000000e+00 : f32
    %23 = vector.broadcast %cst_7 : f32 to vector<8x8x8xf32>
    %24 = arith.maximumf %22, %23 : vector<8x8x8xf32>
    %25 = arith.addf %13, %24 : vector<8x8x8xf32>
    %26 = vector.extract_strided_slice %25 {offsets = [0, 0, 0], sizes = [8, 8, 4], strides = [1, 1, 1]} : vector<8x8x8xf32> to vector<8x8x4xf32>
    %27 = vector.extract_strided_slice %25 {offsets = [0, 0, 4], sizes = [8, 8, 4], strides = [1, 1, 1]} : vector<8x8x8xf32> to vector<8x8x4xf32>
    %28 = arith.addf %26, %27 : vector<8x8x4xf32>
    %29 = vector.shape_cast %28 : vector<8x8x4xf32> to vector<64x4xf32>
    %30 = arith.truncf %29 : vector<64x4xf32> to vector<64x4xbf16>
    %c0_8 = arith.constant 0 : index
    %c0_9 = arith.constant 0 : index
    %31 = vector.load %arg4[%c0_8, %c0_9] : memref<4x128xbf16, #tpu.memory_space<vmem>>, vector<4x128xbf16>
    %cst_10 = arith.constant dense<0.000000e+00> : vector<64x128xf32>
    %32 = tpu.matmul %30, %31, %cst_10 {dimension_numbers = #tpu.dot_dimension_numbers<[1], [0], [0], [1], [0, 0, 1, 1], [], []>} : vector<64x4xbf16>, vector<4x128xbf16>, vector<64x128xf32> -> vector<64x128xf32>
    %33 = arith.truncf %32 : vector<64x128xf32> to vector<64x128xbf16>
    %c0_11 = arith.constant 0 : index
    %c0_12 = arith.constant 0 : index
    %34 = vector.load %arg5[%c0_11, %c0_12] : memref<64x128xbf16, #tpu.memory_space<vmem>>, vector<64x128xbf16>
    tpu.vector_store %arg5[%c0_11, %c0_12], %33 {strides = array<i32>} : memref<64x128xbf16, #tpu.memory_space<vmem>>, vector<64x128xbf16>,
    return
  }
  func.func @transform_0(%arg0: i32) -> (i32, i32, i32, i32) {
    %c0_i32 = arith.constant 0 : i32
    %c0_i32_0 = arith.constant 0 : i32
    %c0_i32_1 = arith.constant 0 : i32
    %c0_i32_2 = arith.constant 0 : i32
    return %arg0, %c0_i32, %c0_i32_0, %c0_i32_1 : i32, i32, i32, i32
  }
  func.func @transform_1(%arg0: i32) -> (i32, i32) {
    %c0_i32 = arith.constant 0 : i32
    %c0_i32_0 = arith.constant 0 : i32
    %c0_i32_1 = arith.constant 0 : i32
    return %c0_i32, %c0_i32_0 : i32, i32
  }
  func.func @transform_2(%arg0: i32) -> (i32, i32) {
    %c0_i32 = arith.constant 0 : i32
    %c0_i32_0 = arith.constant 0 : i32
    %c0_i32_1 = arith.constant 0 : i32
    return %c0_i32, %c0_i32_0 : i32, i32
  }
  func.func @transform_3(%arg0: i32) -> (i32, i32) {
    %c0_i32 = arith.constant 0 : i32
    %c0_i32_0 = arith.constant 0 : i32
    %c0_i32_1 = arith.constant 0 : i32
    return %c0_i32, %c0_i32_0 : i32, i32
  }
  func.func @transform_4(%arg0: i32) -> (i32, i32) {
    %c0_i32 = arith.constant 0 : i32
    %c0_i32_0 = arith.constant 0 : i32
    return %arg0, %c0_i32 : i32, i32
  }
}

</mosaic_0001>

<llo_original>
// kernel: tpu_custom_call.1
$region0: #{tpu_custom_call.1}
  #allocation0 [shape = 'u32[]', space=smem, size = 0x4, offset = 0x4, fixed_abs, tag = 'smem constant byte address 0x4 - core index']
  #allocation1 [shape = 'u32[144,128]{1,0:T(1,128)}', space=vmem, size = 0x12000, scoped, tag = 'internal scratch']
  %s0 = inlined_call_operand.vmem [shape: bf16[16,2,8,8], index: 0, kind: input, shape index: {}]
  %s1 = inlined_call_operand.vmem [shape: f32[1,8], index: 1, kind: input, shape index: {}]
  %s2 = inlined_call_operand.vmem [shape: f32[1,8], index: 2, kind: input, shape index: {}]
  %s3 = inlined_call_operand.vmem [shape: bf16[4,128], index: 3, kind: input, shape index: {}]
  %s4 = inlined_call_operand.hbm [shape: bf16[128,128], index: 4, kind: output, shape index: {}]
  %s5 = sld [smem:[#allocation0]]
  $region49: #{tpu_custom_call.1} parent=0
    _
  %s7 = ssub.s32 1, %s5
  %s8 = scalar_select 0, %s7, %s5
  $region1: #{tpu_custom_call.1} parent=0
    #allocation2 [shape = 'u8[32768]{0}', space=vmem, size = 0x8000, scoped, tag = 'output window, operand 0']
    #allocation3 [shape = 's32[2]{0}', space=sflag, size = 0x8, scoped, tag = 'scoped memory for tpu_custom_call.1']
    %9 = vsyncpa [#allocation3], 0
    %s10 = scalar_lea.sflag [#allocation3], 1
    %11 = vsyncpa %s10, 0
    loop: start=0, step=1, limit=4
    $region2: #{tpu_custom_call.1} parent=1 // loop_pre_header
      _
    $region3: #{tpu_custom_call.1} parent=1 // loop_header
      %s13 = sphi 0, %s17
      %p14 = scmp.ge.s32.totalorder %s13, 4
      %s23 = sphi 0, %s25
      %s26 = sphi 0, %s23
      %s27 = sphi 0, %s26
      %s43 = sphi 0, %s27
      %s47 = sphi 0, %s47
      %s49 = sphi 0, %s47
      %s50 = sphi 0, %s49
      %s64 = sphi 0, %s50
      %s68 = sphi 0, %s68
      %s70 = sphi 0, %s68
      %s71 = sphi 0, %s70
      %s85 = sphi 0, %s71
      %s89 = sphi 0, %s89
      %s91 = sphi 0, %s89
      %s92 = sphi 0, %s91
      %s106 = sphi 0, %s92
      %s112 = sphi 0, %s114
      %s115 = sphi 0, %s112
      %s116 = sphi 0, %s115
      %s132 = sphi 0, %s116
    $region4: #{tpu_custom_call.1} parent=1 // loop_header_branch
      %16 = sbr.rel (%p14) target = $region8
    $region5: #{tpu_custom_call.1} parent=1 // loop_body
      %s18 = ssub.s32 %s13, 1
      %s19 = ssub.s32 %s13, 2
      %s20 = sadd.s32 %s13, 1
      %s21 = ssub.s32 %s13, %s20
      %p22 = scmp.eq.s32.totalorder %s21, 0
      %s24 = sadd.s32 %s23, 1
      %s25 = scalar_select %p22, %s23, %s24
      %p28 = pneg %p22
      %p29 = scmp.eq.s32.totalorder %s13, 1
      %p30 = por %p28, %p29
      %p31 = scmp.ne.s32.totalorder %s23, %s26
      %p32 = scmp.eq.s32.totalorder %s13, 0
      %p33 = por %p31, %p32
      %p34 = scmp.ne.s32.totalorder %s23, %s26
      %p35 = scmp.eq.s32.totalorder %s18, 1
      %p36 = por %p34, %p35
      %p37 = scmp.ne.s32.totalorder %s26, %s27
      %p38 = scmp.eq.s32.totalorder %s18, 0
      %p39 = por %p37, %p38
      %p40 = scmp.ne.s32.totalorder %s26, %s27
      %p41 = scmp.eq.s32.totalorder %s19, 1
      %p42 = por %p40, %p41
      %p44 = scmp.ne.s32.totalorder %s27, %s43
      %p45 = scmp.eq.s32.totalorder %s19, 0
      %p46 = por %p44, %p45
      %s48 = sadd.s32 %s47, 1
      %p51 = scmp.eq.s32.totalorder %s13, 1
      %p52 = scmp.ne.s32.totalorder %s47, %s49
      %p53 = scmp.eq.s32.totalorder %s13, 0
      %p54 = por %p52, %p53
      %p55 = scmp.ne.s32.totalorder %s47, %s49
      %p56 = scmp.eq.s32.totalorder %s18, 1
      %p57 = por %p55, %p56
      %p58 = scmp.ne.s32.totalorder %s49, %s50
      %p59 = scmp.eq.s32.totalorder %s18, 0
      %p60 = por %p58, %p59
      %p61 = scmp.ne.s32.totalorder %s49, %s50
      %p62 = scmp.eq.s32.totalorder %s19, 1
      %p63 = por %p61, %p62
      %p65 = scmp.ne.s32.totalorder %s50, %s64
      %p66 = scmp.eq.s32.totalorder %s19, 0
      %p67 = por %p65, %p66
      %s69 = sadd.s32 %s68, 1
      %p72 = scmp.eq.s32.totalorder %s13, 1
      %p73 = scmp.ne.s32.totalorder %s68, %s70
      %p74 = scmp.eq.s32.totalorder %s13, 0
      %p75 = por %p73, %p74
      %p76 = scmp.ne.s32.totalorder %s68, %s70
      %p77 = scmp.eq.s32.totalorder %s18, 1
      %p78 = por %p76, %p77
      %p79 = scmp.ne.s32.totalorder %s70, %s71
      %p80 = scmp.eq.s32.totalorder %s18, 0
      %p81 = por %p79, %p80
      %p82 = scmp.ne.s32.totalorder %s70, %s71
      %p83 = scmp.eq.s32.totalorder %s19, 1
      %p84 = por %p82, %p83
      %p86 = scmp.ne.s32.totalorder %s71, %s85
      %p87 = scmp.eq.s32.totalorder %s19, 0
      %p88 = por %p86, %p87
      %s90 = sadd.s32 %s89, 1
      %p93 = scmp.eq.s32.totalorder %s13, 1
      %p94 = scmp.ne.s32.totalorder %s89, %s91
      %p95 = scmp.eq.s32.totalorder %s13, 0
      %p96 = por %p94, %p95
      %p97 = scmp.ne.s32.totalorder %s89, %s91
      %p98 = scmp.eq.s32.totalorder %s18, 1
      %p99 = por %p97, %p98
      %p100 = scmp.ne.s32.totalorder %s91, %s92
      %p101 = scmp.eq.s32.totalorder %s18, 0
      %p102 = por %p100, %p101
      %p103 = scmp.ne.s32.totalorder %s91, %s92
      %p104 = scmp.eq.s32.totalorder %s19, 1
      %p105 = por %p103, %p104
      %p107 = scmp.ne.s32.totalorder %s92, %s106
      %p108 = scmp.eq.s32.totalorder %s19, 0
      %p109 = por %p107, %p108
      %s110 = ssub.s32 %s13, %s20
      %p111 = scmp.eq.s32.totalorder %s110, 0
      %s113 = sadd.s32 %s112, 1
      %s114 = scalar_select %p111, %s112, %s113
      %p117 = pneg %p111
      %p118 = scmp.eq.s32.totalorder %s13, 1
      %p119 = por %p117, %p118
      %p120 = scmp.ne.s32.totalorder %s112, %s115
      %p121 = scmp.eq.s32.totalorder %s13, 0
      %p122 = por %p120, %p121
      %p123 = scmp.ne.s32.totalorder %s112, %s115
      %p124 = scmp.eq.s32.totalorder %s18, 1
      %p125 = por %p123, %p124
      %p126 = scmp.ne.s32.totalorder %s115, %s116
      %p127 = scmp.eq.s32.totalorder %s18, 0
      %p128 = por %p126, %p127
      %p129 = scmp.ne.s32.totalorder %s115, %s116
      %p130 = scmp.eq.s32.totalorder %s19, 1
      %p131 = por %p129, %p130
      %p133 = scmp.ne.s32.totalorder %s116, %s132
      %p134 = scmp.eq.s32.totalorder %s19, 0
      %p135 = por %p133, %p134
      %p136 = scmp.le.s32.totalorder 1, %s13
      %p137 = scmp.lt.s32.totalorder %s13, 3
      %p138 = pnand %p136, %p137
      %p139 = pneg %p138
      // Predicated region
      $region9: #{tpu_custom_call.1} parent=5 // pred_check
        _
      $region10: #{tpu_custom_call.1} parent=5 // pred_check_branch
        %141 = sbr.rel (%p138) target = $region12
      $region11: #{tpu_custom_call.1} parent=5 // pred_region
        %s142 = ssub.s32 %s13, 1
        // Predicated region
        $region13: #{tpu_custom_call.1} parent=11 // pred_check
          %p143 = pneg %p60
        $region14: #{tpu_custom_call.1} parent=11 // pred_check_branch
          %145 = sbr.rel (%p143) target = $region16
        $region15: #{tpu_custom_call.1} parent=11 // pred_region
          _
        $region16: #{tpu_custom_call.1} parent=11 // pred_fallthru
          _
        // Predicated region
        $region17: #{tpu_custom_call.1} parent=11 // pred_check
          %p146 = pneg %p81
        $region18: #{tpu_custom_call.1} parent=11 // pred_check_branch
          %148 = sbr.rel (%p146) target = $region20
        $region19: #{tpu_custom_call.1} parent=11 // pred_region
          _
        $region20: #{tpu_custom_call.1} parent=11 // pred_fallthru
          _
        // Predicated region
        $region21: #{tpu_custom_call.1} parent=11 // pred_check
          %p149 = pneg %p102
        $region22: #{tpu_custom_call.1} parent=11 // pred_check_branch
          %151 = sbr.rel (%p149) target = $region24
        $region23: #{tpu_custom_call.1} parent=11 // pred_region
          _
        $region24: #{tpu_custom_call.1} parent=11 // pred_fallthru
          _
      $region12: #{tpu_custom_call.1} parent=5 // pred_fallthru
        _
      %p152 = scmp.lt.s32.totalorder %s13, 2
      // Predicated region
      $region25: #{tpu_custom_call.1} parent=5 // pred_check
        %p153 = pneg %p152
      $region26: #{tpu_custom_call.1} parent=5 // pred_check_branch
        %155 = sbr.rel (%p153) target = $region28
      $region27: #{tpu_custom_call.1} parent=5 // pred_region
        // Predicated region
        $region29: #{tpu_custom_call.1} parent=27 // pred_check
          %p156 = pneg %p33
        $region30: #{tpu_custom_call.1} parent=27 // pred_check_branch
          %158 = sbr.rel (%p156) target = $region32
        $region31: #{tpu_custom_call.1} parent=27 // pred_region
          %s159 = smul.u32 8, %s13
          %p160 = scmp.lt.s32.totalorder %s159, 15
          %s161 = scalar_select %p160, %s159, 15
          %s162 = smul.addr %s161, 2
          %s163 = smul.addr %s162, 4
          %s164 = scalar_lea.vmem %s0, %s163
          %s165 = smul.u32 8, %s13
        $region32: #{tpu_custom_call.1} parent=27 // pred_fallthru
          _
      $region28: #{tpu_custom_call.1} parent=5 // pred_fallthru
        _
      %p166 = scmp.le.s32.totalorder 1, %s13
      %p167 = scmp.lt.s32.totalorder %s13, 3
      %p168 = pnand %p166, %p167
      %p169 = pneg %p168
      // Predicated region
      $region33: #{tpu_custom_call.1} parent=5 // pred_check
        _
      $region34: #{tpu_custom_call.1} parent=5 // pred_check_branch
        %171 = sbr.rel (%p168) target = $region36
      $region35: #{tpu_custom_call.1} parent=5 // pred_region
        %s172 = ssub.s32 %s13, 1
        %s173 = smul.u32 8, %s18
        %p174 = scmp.lt.s32.totalorder %s173, 15
        %s175 = scalar_select %p174, %s173, 15
        %s176 = smul.addr %s175, 2
        %s177 = smul.addr %s176, 4
        %s178 = scalar_lea.vmem %s0, %s177
        %p179 = pneg %p39
        %p180 = pneg %p36
        %p181 = pneg %p60
        %p182 = pneg %p57
        %p183 = pneg %p81
        %p184 = pneg %p78
        %p185 = pneg %p102
        %p186 = pneg %p99
        %p187 = pneg %p128
        %p188 = pneg %p125
        %s189 = sand.u32 %s115, 1
        %s190 = scalar_lea.sflag [#allocation3], %s189
        %s191 = sand.u32 %s115, 1
        %s192 = smul.addr %s191, 32
        %s193 = scalar_lea.vmem [#allocation2], %s192
        %s194 = smul.u32 8, %s18
        %p195 = scmp.lt.s32.totalorder %s194, 15
        %s196 = scalar_select %p195, %s194, 15
        %s197 = smul.addr %s196, 2
        %s198 = smul.addr %s197, 4
        %s199 = scalar_lea.vmem %s0, %s198
        %s200 = smul.u32 8, %s18
        %s201 = smul.u32 8, %s18
        %v203 = vld [vmem:[%s1] sm:$0x1]
        %v204 = vld [vmem:[%s2] sm:$0x1]
        %v205 = vld [vmem:[%s199] sm:$0xf]
        %v206 = vld [vmem:[%s199 + $0x4] sm:$0xf]
        %v207 = vld [vmem:[%s199 + $0x8] sm:$0xf]
        %v208 = vld [vmem:[%s199 + $0xc] sm:$0xf]
        %v209 = vld [vmem:[%s199 + $0x10] sm:$0xf]
        %v210 = vld [vmem:[%s199 + $0x14] sm:$0xf]
        %v211 = vld [vmem:[%s199 + $0x18] sm:$0xf]
        %v212 = vld [vmem:[%s199 + $0x1c] sm:$0xf]
        %v213 = vld [vmem:[%s199 + $0x20] sm:$0xf]
        %v214 = vld [vmem:[%s199 + $0x24] sm:$0xf]
        %v215 = vld [vmem:[%s199 + $0x28] sm:$0xf]
        %v216 = vld [vmem:[%s199 + $0x2c] sm:$0xf]
        %v217 = vld [vmem:[%s199 + $0x30] sm:$0xf]
        %v218 = vld [vmem:[%s199 + $0x34] sm:$0xf]
        %v219 = vld [vmem:[%s199 + $0x38] sm:$0xf]
        %v220 = vld [vmem:[%s199 + $0x3c] sm:$0xf]
        %v221 = vunpack.c.l.bf16 %v205
        %v222 = vunpack.c.l.bf16 %v207
        %v223 = vunpack.c.l.bf16 %v209
        %v224 = vunpack.c.l.bf16 %v211
        %v225 = vunpack.c.l.bf16 %v213
        %v226 = vunpack.c.l.bf16 %v215
        %v227 = vunpack.c.l.bf16 %v217
        %v228 = vunpack.c.l.bf16 %v219
        %v230 = vlaneseq
        %v231 = vshrl.u32 %v230, 7
        %v232 = vsub.s32 0, %v231
        %v233 = vrot.slane %v203, %v232
        %v235 = vmul.f32 %v221, %v233
        %v236 = vmul.f32 %v222, %v233
        %v237 = vmul.f32 %v223, %v233
        %v238 = vmul.f32 %v224, %v233
        %v239 = vmul.f32 %v225, %v233
        %v240 = vmul.f32 %v226, %v233
        %v241 = vmul.f32 %v227, %v233
        %v242 = vmul.f32 %v228, %v233
        %v244 = vlaneseq
        %v245 = vshrl.u32 %v244, 7
        %v246 = vsub.s32 0, %v245
        %v247 = vrot.slane %v204, %v246
        %v249 = vadd.f32 %v235, %v247
        %v250 = vadd.f32 %v236, %v247
        %v251 = vadd.f32 %v237, %v247
        %v252 = vadd.f32 %v238, %v247
        %v253 = vadd.f32 %v239, %v247
        %v254 = vadd.f32 %v240, %v247
        %v255 = vadd.f32 %v241, %v247
        %v256 = vadd.f32 %v242, %v247
        %v257 = vmax.f32 %v249, 0.0
        %v258 = vmax.f32 %v250, 0.0
        %v259 = vmax.f32 %v251, 0.0
        %v260 = vmax.f32 %v252, 0.0
        %v261 = vmax.f32 %v253, 0.0
        %v262 = vmax.f32 %v254, 0.0
        %v263 = vmax.f32 %v255, 0.0
        %v264 = vmax.f32 %v256, 0.0
        %v265 = vunpack.c.l.bf16 %v206
        %v266 = vunpack.c.l.bf16 %v208
        %v267 = vunpack.c.l.bf16 %v210
        %v268 = vunpack.c.l.bf16 %v212
        %v269 = vunpack.c.l.bf16 %v214
        %v270 = vunpack.c.l.bf16 %v216
        %v271 = vunpack.c.l.bf16 %v218
        %v272 = vunpack.c.l.bf16 %v220
        %v273 = vmul.f32 %v265, %v233
        %v274 = vmul.f32 %v266, %v233
        %v275 = vmul.f32 %v267, %v233
        %v276 = vmul.f32 %v268, %v233
        %v277 = vmul.f32 %v269, %v233
        %v278 = vmul.f32 %v270, %v233
        %v279 = vmul.f32 %v271, %v233
        %v280 = vmul.f32 %v272, %v233
        %v281 = vadd.f32 %v273, %v247
        %v282 = vadd.f32 %v274, %v247
        %v283 = vadd.f32 %v275, %v247
        %v284 = vadd.f32 %v276, %v247
        %v285 = vadd.f32 %v277, %v247
        %v286 = vadd.f32 %v278, %v247
        %v287 = vadd.f32 %v279, %v247
        %v288 = vadd.f32 %v280, %v247
        %v289 = vmax.f32 %v281, 0.0
        %v290 = vmax.f32 %v282, 0.0
        %v291 = vmax.f32 %v283, 0.0
        %v292 = vmax.f32 %v284, 0.0
        %v293 = vmax.f32 %v285, 0.0
        %v294 = vmax.f32 %v286, 0.0
        %v295 = vmax.f32 %v287, 0.0
        %v296 = vmax.f32 %v288, 0.0
        %v297 = vadd.f32 %v257, %v289
        %v298 = vadd.f32 %v258, %v290
        %v299 = vadd.f32 %v259, %v291
        %v300 = vadd.f32 %v260, %v292
        %v301 = vadd.f32 %v261, %v293
        %v302 = vadd.f32 %v262, %v294
        %v303 = vadd.f32 %v263, %v295
        %v304 = vadd.f32 %v264, %v296
        %313 = vrot.lane.b32.xlu0 %v297, 124
        %v314 = vpop.permute.xlu0 %313
        %315 = vrot.lane.b32.xlu0 %v298, 124
        %v316 = vpop.permute.xlu0 %315
        %317 = vrot.lane.b32.xlu0 %v299, 124
        %v318 = vpop.permute.xlu0 %317
        %319 = vrot.lane.b32.xlu0 %v300, 124
        %v320 = vpop.permute.xlu0 %319
        %321 = vrot.lane.b32.xlu0 %v301, 124
        %v322 = vpop.permute.xlu0 %321
        %323 = vrot.lane.b32.xlu0 %v302, 124
        %v324 = vpop.permute.xlu0 %323
        %325 = vrot.lane.b32.xlu0 %v303, 124
        %v326 = vpop.permute.xlu0 %325
        %327 = vrot.lane.b32.xlu0 %v304, 124
        %v328 = vpop.permute.xlu0 %327
        %v337 = vadd.f32 %v297, %v314
        %v338 = vadd.f32 %v298, %v316
        %v339 = vadd.f32 %v299, %v318
        %v340 = vadd.f32 %v300, %v320
        %v341 = vadd.f32 %v301, %v322
        %v342 = vadd.f32 %v302, %v324
        %v343 = vadd.f32 %v303, %v326
        %v344 = vadd.f32 %v304, %v328
        %v345 = vpack.c.bf16 %v338, %v337
        %v346 = vpack.c.bf16 %v340, %v339
        %v347 = vpack.c.bf16 %v342, %v341
        %v348 = vpack.c.bf16 %v344, %v343
        %v349 = vld [vmem:[%s3] sm:$0x3]
        %vm350 = vcmask 31744
        %v352 = vsel %vm350, %v345, 0
        %v355 = vsel %vm350, %v346, 0
        %v358 = vsel %vm350, %v347, 0
        %v361 = vsel %vm350, %v348, 0
        %vm363 = vcmask 1041408
        %v365 = vsel %vm363, %v349, 0
        %367 = vmatprep.subr.bf16.mxu0 0
        %368 = vmatpush1.bf16.msra.mxu0 %v365
        %369 = vmatprep.subr.bf16.mxu0 0
        %370 = vmatpush1.bf16.msra.mxu0 0
        %371 = vmatprep.subr.bf16.mxu0 0
        %372 = vmatpush1.bf16.msra.mxu0 0
        %373 = vmatprep.subr.bf16.mxu0 0
        %374 = vmatpush1.bf16.msra.mxu0 0
        %375 = vmatprep.subr.bf16.mxu0 0
        %376 = vmatpush1.bf16.msra.mxu0 0
        %377 = vmatprep.subr.bf16.mxu0 0
        %378 = vmatpush1.bf16.msra.mxu0 0
        %379 = vmatprep.subr.bf16.mxu0 0
        %380 = vmatpush1.bf16.msra.mxu0 0
        %381 = vmatprep.subr.bf16.mxu0 0
        %382 = vmatpush1.bf16.msra.mxu0 0
        %383 = vmatprep.subr.bf16.mxu0 0
        %384 = vmatpush1.bf16.msra.mxu0 0
        %385 = vmatprep.subr.bf16.mxu0 0
        %386 = vmatpush1.bf16.msra.mxu0 0
        %387 = vmatprep.subr.bf16.mxu0 0
        %388 = vmatpush1.bf16.msra.mxu0 0
        %389 = vmatprep.subr.bf16.mxu0 0
        %390 = vmatpush1.bf16.msra.mxu0 0
        %391 = vmatprep.subr.bf16.mxu0 0
        %392 = vmatpush1.bf16.msra.mxu0 0
        %393 = vmatprep.subr.bf16.mxu0 0
        %394 = vmatpush1.bf16.msra.mxu0 0
        %395 = vmatprep.subr.bf16.mxu0 0
        %396 = vmatpush1.bf16.msra.mxu0 0
        %397 = vmatprep.subr.bf16.mxu0 0
        %398 = vmatpush1.bf16.msra.mxu0 0
        %399 = vmatprep.mubr.bf16.mxu0 0
        %400 = vmatmul.mubr.bf16.gmra.mrb[0].mxu0 %v352
        %v401 = vpop.f32.mrb[0].mxu0
        %v402 = vadd.f32 0.0, %v401
        %v403 = vpop.f32.mrb[0].mxu0
        %v404 = vpop.f32.mrb[0].mxu0
        %v405 = vadd.f32 0.0, %v404
        %v406 = vpop.f32.mrb[0].mxu0
        %407 = vmatprep.mubr.bf16.mxu0 0
        %408 = vmatmul.mubr.bf16.gmra.mrb[0].mxu0 %v355
        %v409 = vpop.f32.mrb[0].mxu0
        %v410 = vadd.f32 0.0, %v409
        %v411 = vpop.f32.mrb[0].mxu0
        %v412 = vpop.f32.mrb[0].mxu0
        %v413 = vadd.f32 0.0, %v412
        %v414 = vpop.f32.mrb[0].mxu0
        %415 = vmatprep.mubr.bf16.mxu0 0
        %416 = vmatmul.mubr.bf16.gmra.mrb[0].mxu0 %v358
        %v417 = vpop.f32.mrb[0].mxu0
        %v418 = vadd.f32 0.0, %v417
        %v419 = vpop.f32.mrb[0].mxu0
        %v420 = vpop.f32.mrb[0].mxu0
        %v421 = vadd.f32 0.0, %v420
        %v422 = vpop.f32.mrb[0].mxu0
        %423 = vmatprep.mubr.bf16.mxu0 0
        %424 = vmatmul.mubr.bf16.gmra.mrb[0].mxu0 %v361
        %v425 = vpop.f32.mrb[0].mxu0
        %v426 = vadd.f32 0.0, %v425
        %v427 = vpop.f32.mrb[0].mxu0
        %v428 = vpop.f32.mrb[0].mxu0
        %v429 = vadd.f32 0.0, %v428
        %v430 = vpop.f32.mrb[0].mxu0
        %431 = vdwg.mxu0
        %v432 = vpack.c.bf16 %v405, %v402
        %v433 = vpack.c.bf16 %v413, %v410
        %v434 = vpack.c.bf16 %v421, %v418
        %v435 = vpack.c.bf16 %v429, %v426
        %v440 = vunpack.c.l.b16 %v432
        %v441 = vunpack.c.h.b16 %v432
        %v442 = vunpack.c.l.b16 %v433
        %v443 = vunpack.c.h.b16 %v433
        %v444 = vunpack.c.l.b16 %v434
        %v445 = vunpack.c.h.b16 %v434
        %v446 = vunpack.c.l.b16 %v435
        %v447 = vunpack.c.h.b16 %v435
        %v448 = vpack.c.b16 %v440, %v440
        %v449 = vpack.c.b16 %v441, %v441
        %v450 = vpack.c.b16 %v442, %v442
        %v451 = vpack.c.b16 %v443, %v443
        %v452 = vpack.c.b16 %v444, %v444
        %v453 = vpack.c.b16 %v445, %v445
        %v454 = vpack.c.b16 %v446, %v446
        %v455 = vpack.c.b16 %v447, %v447
        %464 = vst [vmem:[%s193] sm:$0xf] %v448
        %465 = vst [vmem:[%s193 + $0x4] sm:$0xf] %v449
        %466 = vst [vmem:[%s193 + $0x8] sm:$0xf] %v450
        %467 = vst [vmem:[%s193 + $0xc] sm:$0xf] %v451
        %468 = vst [vmem:[%s193 + $0x10] sm:$0xf] %v452
        %469 = vst [vmem:[%s193 + $0x14] sm:$0xf] %v453
        %470 = vst [vmem:[%s193 + $0x18] sm:$0xf] %v454
        %471 = vst [vmem:[%s193 + $0x1c] sm:$0xf] %v455
        %s472 = sand.u32 %s115, 1
        %s473 = scalar_lea.sflag [#allocation3], %s472
        %s474 = sand.u32 %s115, 1
        %s475 = smul.addr %s474, 32
        %s476 = scalar_lea.vmem [#allocation2], %s475
        // Predicated region
        $region37: #{tpu_custom_call.1} parent=35 // pred_check
          %p477 = pneg %p125
        $region38: #{tpu_custom_call.1} parent=35 // pred_check_branch
          %479 = sbr.rel (%p477) target = $region40
        $region39: #{tpu_custom_call.1} parent=35 // pred_region
          %s480 = smul.u32 8, %s18
          %s482 = ssub.s32 512, 512
          %483 = vsyncadd %s473, %s482
          %s484 = smul.addr %s480, 64
          %s485 = scalar_lea.hbm %s4, %s484
          %s486 = sshll.u32 %s476, 4
          %s487 = int_to_ptr.vmem [resolvable:$true] %s486
          %492 = dma.vmem_to_hbm [thread:$0]  %s487, 512, %s485, %s473, 64, 64, 4
        $region40: #{tpu_custom_call.1} parent=35 // pred_fallthru
          _
      $region36: #{tpu_custom_call.1} parent=5 // pred_fallthru
        _
      %p493 = scmp.le.s32.totalorder 2, %s13
      // Predicated region
      $region41: #{tpu_custom_call.1} parent=5 // pred_check
        %p494 = pneg %p493
      $region42: #{tpu_custom_call.1} parent=5 // pred_check_branch
        %496 = sbr.rel (%p494) target = $region44
      $region43: #{tpu_custom_call.1} parent=5 // pred_region
        %s497 = ssub.s32 %s13, 2
        // Predicated region
        $region45: #{tpu_custom_call.1} parent=43 // pred_check
          %p498 = pneg %p131
        $region46: #{tpu_custom_call.1} parent=43 // pred_check_branch
          %500 = sbr.rel (%p498) target = $region48
        $region47: #{tpu_custom_call.1} parent=43 // pred_region
          %s501 = sand.u32 %s116, 1
          %s502 = scalar_lea.sflag [#allocation3], %s501
          %s503 = sand.u32 %s116, 1
          %s504 = smul.addr %s503, 32
          %s505 = scalar_lea.vmem [#allocation2], %s504
          %506 = dma.done %s502, 512
        $region48: #{tpu_custom_call.1} parent=43 // pred_fallthru
          _
      $region44: #{tpu_custom_call.1} parent=5 // pred_fallthru
        _
    $region6: #{tpu_custom_call.1} parent=1 // loop_footer
      %s17 = sadd.s32 1, %s13
    $region7: #{tpu_custom_call.1} parent=1 // loop_footer_branch
      %12 = sbr.rel target = $region3
    $region8: #{tpu_custom_call.1} parent=1 // loop_exit
      _
    %507 = vsyncpa [#allocation3], 1
    %s508 = scalar_lea.sflag [#allocation3], 1
    %509 = vsyncpa %s508, 1

</llo_original>
